<compile_context>
chip_gen: v7x
topology: tpu7x:2x2x1
jax: 0.10.0
libtpu: 0.0.40
codegen_flags: <defaults>
</compile_context>

<pallas_src>
import functools

import jax
import jax.numpy as jnp
from jax.experimental import pallas as pl
from jax.experimental.pallas import tpu as pltpu


def _round_up(n, m):
    return ((n + m - 1) // m) * m


# ---------------------------------------------------------------------------
# Kernel (feature-major: activations are (features, batch_tile))
# ---------------------------------------------------------------------------
def _critic_kernel(x_ref, w1_ref, b1_ref, w2_ref, b2_ref, w3_ref, b3_ref,
                   o_ref, *, b3_scalar):
    wdt = w1_ref.dtype   # weight storage dtype (bf16 by default)

    # In-kernel cast of the activations (near-free VPU op, hidden under the
    # matmuls); no separate wrapper-side astype pass over s/a in HBM.
    x = x_ref[...].astype(wdt)                                        # (in, tb)

    # Layer 1: one fused K=in_size matmul (single MXU contraction instead of
    # two under-filled K=12 / K=4 ones).  f32 accumulate, f32 bias + ReLU.
    h1 = jnp.dot(w1_ref[...], x, preferred_element_type=jnp.float32)  # (Hp, tb)
    h1 = jnp.maximum(h1 + b1_ref[...], 0.0)

    # Layer 2.
    h2 = jnp.dot(w2_ref[...], h1.astype(wdt),
                 preferred_element_type=jnp.float32)                  # (Hp, tb)
    h2 = jnp.maximum(h2 + b2_ref[...], 0.0)

    # Layer 3: standard MXU contraction.  Result (out_size, tb) is lane-dense
    # (batch on the lane axis) -> unmasked full-lane stores, and no XLU
    # lane-reduction competing for the 2 XLUs on v6e/v7x.
    out = jnp.dot(w3_ref[...], h2.astype(wdt),
                  preferred_element_type=jnp.float32)                 # (out, tb)
    if b3_scalar:
        out = out + b3_ref[0, 0]          # scalar bias read straight from SMEM
    else:
        out = out + b3_ref[...]
    o_ref[...] = out.astype(o_ref.dtype)


# ---------------------------------------------------------------------------
# Batch-tile selection
# ---------------------------------------------------------------------------
def _choose_batch_tile(B, block_batch):
    """Pick the batch tile (the lane axis inside the kernel).

    - As large as `block_batch` (default 1024, sweep 1024-2048) to amortize
      the ~0.35 us per-grid-step overhead; per-step VMEM stays in the low MBs.
    - At least 2 grid steps once B >= 256 so the "parallel" batch axis can
      actually split across the two TensorCores on v7x.
    - Partial tiles are multiples of 128 so every block keeps the lane axis
      dense (also satisfies the 8/16-sublane packing rules).
    """
    tb = min(block_batch, B)
    if B >= 256:
        tb = min(tb, (B + 1) // 2)
    if tb < B:
        tb = _round_up(tb, 128)
        if tb >= B:
            tb = B
    return tb


# ---------------------------------------------------------------------------
# Wrapper
# ---------------------------------------------------------------------------
def critic_forward(s, a, packed_params, *, block_batch=1024):
    """Pallas forward pass.  s: (B, Ds) f32, a: (B, Da) f32.

    `packed_params` comes from `pack_critic_params` (feature-major weights,
    lane-padded hidden, bf16 storage by default)."""
    w1, b1, w2, b2, w3, b3 = packed_params
    B = s.shape[0]
    in_size = s.shape[1] + a.shape[1]
    Hp = w2.shape[0]
    out_size = w3.shape[0]
    b3_scalar = (out_size == 1)

    # Single fused input stream, feature-major: (in_size, B).  One cheap
    # wrapper op; avoids a second DMA stream and a second tiny-K MXU dot.
    x = jnp.concatenate([s, a], axis=1).T

    tb = _choose_batch_tile(B, block_batch)

    # VMEM guard (v7x: 64 MiB physical / 32 MiB default scoped).  Weights are
    # resident; activations / intermediates scale with tb * Hp.
    def _vmem_bytes(t):
        wbytes = sum(int(p.size) * p.dtype.itemsize
                     for p in (w1, b1, w2, b2, w3, b3))
        act = 2 * in_size * t * 4            # x tile, double-buffered
        inter = 3 * Hp * t * 4               # h1/h2 + cast temporaries (rough)
        outb = 2 * out_size * t * 4
        return 2 * wbytes + act + inter + outb

    while tb > 128 and _vmem_bytes(tb) > 24 * 1024 * 1024:
        tb = max(128, _round_up(tb // 2, 128))

    grid = (pl.cdiv(B, tb),)

    const = lambda i: (0, 0)   # weights/biases: same block every grid step
    in_specs = [
        pl.BlockSpec((in_size, tb), lambda i: (0, i)),   # x, tiled on batch
        pl.BlockSpec(w1.shape, const),
        pl.BlockSpec(b1.shape, const),
        pl.BlockSpec(w2.shape, const),
        pl.BlockSpec(b2.shape, const),
        pl.BlockSpec(w3.shape, const),
    ]
    if b3_scalar:
        # One scalar: keep it in SMEM instead of burning an (8,128) VMEM tile
        # plus a DMA descriptor on it.
        in_specs.append(pl.BlockSpec(memory_space=pltpu.MemorySpace.SMEM))
    else:
        in_specs.append(pl.BlockSpec(b3.shape, const))

    flops = 2 * B * (in_size * Hp + Hp * Hp + Hp * out_size)
    bytes_accessed = int(
        x.size * 4 + B * out_size * 4
        + sum(int(p.size) * p.dtype.itemsize for p in packed_params))

    kernel = functools.partial(_critic_kernel, b3_scalar=b3_scalar)

    out_t = pl.pallas_call(
        kernel,
        out_shape=jax.ShapeDtypeStruct((out_size, B), jnp.float32),
        grid=grid,
        in_specs=in_specs,
        out_specs=pl.BlockSpec((out_size, tb), lambda i: (0, i)),  # lane-dense
        compiler_params=pltpu.CompilerParams(
            # Batch axis shards across the 2 TCs on v7x; pltpu.CORE_PARALLEL
            # is a candidate to try there, plain "parallel" kept for
            # portability across v5e/v6e.
            dimension_semantics=("parallel",),
            # Explicit scoped-VMEM budget (v5e default is only 16 MiB).
            vmem_limit_bytes=32 * 1024 * 1024,
        ),
        cost_estimate=pl.CostEstimate(
            flops=flops, transcendentals=0, bytes_accessed=bytes_accessed),
    )(x, w1, b1, w2, b2, w3, b3)

    return out_t.T   # (B, out_size)


# ---------------------------------------------------------------------------
# Parameter init (matches nn.Linear default: uniform +/- 1/sqrt(fan_in)).
# Logical (unpadded) weights, stored as (in, out) for the pure-JAX reference.
# ---------------------------------------------------------------------------
def init_critic_params(key, input_size, hidden_size, output_size):
    ks = jax.random.split(key, 6)

    def linear(kw, kb, fan_in, fan_out):
        bound = 1.0 / jnp.sqrt(jnp.float32(fan_in))
        w = jax.random.uniform(kw, (fan_in, fan_out), jnp.float32, -bound, bound)
        b = jax.random.uniform(kb, (1, fan_out), jnp.float32, -bound, bound)
        return w, b

    w1, b1 = linear(ks[0], ks[1], input_size, hidden_size)
    w2, b2 = linear(ks[2], ks[3], hidden_size, hidden_size)
    w3, b3 = linear(ks[4], ks[5], hidden_size, output_size)
    return (w1, b1, w2, b2, w3, b3)


def pack_critic_params(params, *, dtype=jnp.bfloat16):
    """Repack to feature-major (out_features, in_features) layout, zero-pad
    hidden to a multiple of 128 lanes, cast weights to `dtype` (bf16 default;
    pass jnp.float32 for a debug path that runs multi-pass f32 MXU matmuls).

    Zero padding is semantics-preserving: padded h1/h2 rows are exactly 0 and
    padded W2/W3 input columns are 0, so they never contribute to the output."""
    w1, b1, w2, b2, w3, b3 = params
    in_size, hidden = w1.shape
    out_size = w3.shape[1]
    hp = _round_up(hidden, 128)

    def pad_to(arr, shape):
        return jnp.pad(arr, [(0, t - s) for s, t in zip(arr.shape, shape)])

    w1p = pad_to(w1.T, (hp, in_size)).astype(dtype)
    b1p = pad_to(b1.reshape(hidden, 1), (hp, 1)).astype(jnp.float32)
    w2p = pad_to(w2.T, (hp, hp)).astype(dtype)
    b2p = pad_to(b2.reshape(hidden, 1), (hp, 1)).astype(jnp.float32)
    w3p = pad_to(w3.T, (out_size, hp)).astype(dtype)
    b3p = b3.reshape(out_size, 1).astype(jnp.float32)
    return (w1p, b1p, w2p, b2p, w3p, b3p)


# ---------------------------------------------------------------------------
# Pure-JAX reference (spec-faithful: concat + 3 Linear layers).
# ---------------------------------------------------------------------------
def critic_reference(s, a, params):
    w1, b1, w2, b2, w3, b3 = params
    x = jnp.concatenate([s, a], axis=1)
    x = jnp.maximum(x @ w1 + b1, 0.0)
    x = jnp.maximum(x @ w2 + b2, 0.0)
    return x @ w3 + b3


if __name__ == "__main__":
    # DDPG-critic-like shapes: state dim 12, action dim 4 -> input 16,
    # hidden 32, output 1, batch 8.
    batch, state_dim, action_dim = 8, 12, 4
    input_size, hidden_size, output_size = state_dim + action_dim, 32, 1

    key = jax.random.PRNGKey(0)
    k_s, k_a, k_p, k_s2, k_a2 = jax.random.split(key, 5)
    s = jax.random.normal(k_s, (batch, state_dim), jnp.float32)
    a = jax.random.normal(k_a, (batch, action_dim), jnp.float32)
    params = init_critic_params(k_p, input_size, hidden_size, output_size)
    ref = critic_reference(s, a, params)

    # bf16 weight storage (default: native MXU dtype, halves weight HBM/VMEM).
    packed = pack_critic_params(params)
    out = jax.block_until_ready(critic_forward(s, a, packed))
    assert out.shape == (batch, output_size)
    assert jnp.allclose(out, ref, atol=5e-2, rtol=5e-2), "bf16 path mismatch"

    # f32 debug path.
    packed_f32 = pack_critic_params(params, dtype=jnp.float32)
    out_f32 = jax.block_until_ready(critic_forward(s, a, packed_f32))
    assert out_f32.shape == (batch, output_size)
    assert jnp.allclose(out_f32, ref, atol=1e-3, rtol=1e-3), "f32 path mismatch"

    # Larger batch: exercises the multi-step grid (2-TC split on v7x) and a
    # partial last tile.
    big = 384
    s2 = jax.random.normal(k_s2, (big, state_dim), jnp.float32)
    a2 = jax.random.normal(k_a2, (big, action_dim), jnp.float32)
    ref2 = critic_reference(s2, a2, params)
    out2 = jax.block_until_ready(critic_forward(s2, a2, packed))
    assert out2.shape == (big, output_size)
    assert jnp.allclose(out2, ref2, atol=5e-2, rtol=5e-2), "tiled bf16 mismatch"

    print("KERNEL_OK")
</pallas_src>

<mosaic_0001>
module attributes {stable_mosaic.version = 11 : i64} {
  func.func @_critic_kernel(%arg0: i32, %arg1: memref<16x8xf32, #tpu.memory_space<vmem>>, %arg2: memref<128x16xbf16, #tpu.memory_space<vmem>>, %arg3: memref<128x1xf32, #tpu.memory_space<vmem>>, %arg4: memref<128x128xbf16, #tpu.memory_space<vmem>>, %arg5: memref<128x1xf32, #tpu.memory_space<vmem>>, %arg6: memref<1x128xbf16, #tpu.memory_space<vmem>>, %arg7: memref<1x1xf32, #tpu.memory_space<smem>>, %arg8: memref<1x8xf32, #tpu.memory_space<vmem>>) attributes {dimension_semantics = [#tpu.dimension_semantics<parallel>], iteration_bounds = array<i64: 1>, scalar_prefetch = 0 : i64, scratch_operands = 0 : i64, tpu.core_type = #tpu.core_type<tc>, window_params = [{transform_indices = @transform_0, window_bounds = array<i64: 16, 8>}, {pipeline_mode = #tpu.pipeline_mode<synchronous>, transform_indices = @transform_1, window_bounds = array<i64: 128, 16>}, {pipeline_mode = #tpu.pipeline_mode<synchronous>, transform_indices = @transform_2, window_bounds = array<i64: 128, 1>}, {pipeline_mode = #tpu.pipeline_mode<synchronous>, transform_indices = @transform_3, window_bounds = array<i64: 128, 128>}, {pipeline_mode = #tpu.pipeline_mode<synchronous>, transform_indices = @transform_4, window_bounds = array<i64: 128, 1>}, {pipeline_mode = #tpu.pipeline_mode<synchronous>, transform_indices = @transform_5, window_bounds = array<i64: 1, 128>}, {transform_indices = @transform_6, window_bounds = array<i64: 1, 1>}, {transform_indices = @transform_7, window_bounds = array<i64: 1, 8>}]} {
    %c0 = arith.constant 0 : index
    %c0_0 = arith.constant 0 : index
    %0 = vector.load %arg1[%c0, %c0_0] : memref<16x8xf32, #tpu.memory_space<vmem>>, vector<16x8xf32>
    %1 = arith.truncf %0 : vector<16x8xf32> to vector<16x8xbf16>
    %c0_1 = arith.constant 0 : index
    %c0_2 = arith.constant 0 : index
    %2 = vector.load %arg2[%c0_1, %c0_2] : memref<128x16xbf16, #tpu.memory_space<vmem>>, vector<128x16xbf16>
    %cst = arith.constant dense<0.000000e+00> : vector<128x8xf32>
    %3 = tpu.matmul %2, %1, %cst {dimension_numbers = #tpu.dot_dimension_numbers<[1], [0], [0], [1], [0, 0, 1, 1], [], []>} : vector<128x16xbf16>, vector<16x8xbf16>, vector<128x8xf32> -> vector<128x8xf32>
    %c0_3 = arith.constant 0 : index
    %c0_4 = arith.constant 0 : index
    %4 = vector.load %arg3[%c0_3, %c0_4] : memref<128x1xf32, #tpu.memory_space<vmem>>, vector<128x1xf32>
    %5 = vector.broadcast %4 : vector<128x1xf32> to vector<128x8xf32>
    %6 = arith.addf %3, %5 : vector<128x8xf32>
    %cst_5 = arith.constant 0.000000e+00 : f32
    %7 = vector.broadcast %cst_5 : f32 to vector<128x8xf32>
    %8 = arith.maximumf %6, %7 : vector<128x8xf32>
    %c0_6 = arith.constant 0 : index
    %c0_7 = arith.constant 0 : index
    %9 = vector.load %arg4[%c0_6, %c0_7] : memref<128x128xbf16, #tpu.memory_space<vmem>>, vector<128x128xbf16>
    %10 = arith.truncf %8 : vector<128x8xf32> to vector<128x8xbf16>
    %cst_8 = arith.constant dense<0.000000e+00> : vector<128x8xf32>
    %11 = tpu.matmul %9, %10, %cst_8 {dimension_numbers = #tpu.dot_dimension_numbers<[1], [0], [0], [1], [0, 0, 1, 1], [], []>} : vector<128x128xbf16>, vector<128x8xbf16>, vector<128x8xf32> -> vector<128x8xf32>
    %c0_9 = arith.constant 0 : index
    %c0_10 = arith.constant 0 : index
    %12 = vector.load %arg5[%c0_9, %c0_10] : memref<128x1xf32, #tpu.memory_space<vmem>>, vector<128x1xf32>
    %13 = vector.broadcast %12 : vector<128x1xf32> to vector<128x8xf32>
    %14 = arith.addf %11, %13 : vector<128x8xf32>
    %cst_11 = arith.constant 0.000000e+00 : f32
    %15 = vector.broadcast %cst_11 : f32 to vector<128x8xf32>
    %16 = arith.maximumf %14, %15 : vector<128x8xf32>
    %c0_12 = arith.constant 0 : index
    %c0_13 = arith.constant 0 : index
    %17 = vector.load %arg6[%c0_12, %c0_13] : memref<1x128xbf16, #tpu.memory_space<vmem>>, vector<1x128xbf16>
    %18 = arith.truncf %16 : vector<128x8xf32> to vector<128x8xbf16>
    %cst_14 = arith.constant dense<0.000000e+00> : vector<1x8xf32>
    %19 = tpu.matmul %17, %18, %cst_14 {dimension_numbers = #tpu.dot_dimension_numbers<[1], [0], [0], [1], [0, 0, 1, 1], [], []>} : vector<1x128xbf16>, vector<128x8xbf16>, vector<1x8xf32> -> vector<1x8xf32>
    %c0_15 = arith.constant 0 : index
    %c0_16 = arith.constant 0 : index
    %20 = memref.load %arg7[%c0_15, %c0_16] : memref<1x1xf32, #tpu.memory_space<smem>>
    %21 = vector.broadcast %20 : f32 to vector<1x8xf32>
    %22 = arith.addf %19, %21 : vector<1x8xf32>
    %c0_17 = arith.constant 0 : index
    %c0_18 = arith.constant 0 : index
    %23 = vector.load %arg8[%c0_17, %c0_18] : memref<1x8xf32, #tpu.memory_space<vmem>>, vector<1x8xf32>
    tpu.vector_store %arg8[%c0_17, %c0_18], %22 {strides = array<i32>} : memref<1x8xf32, #tpu.memory_space<vmem>>, vector<1x8xf32>,
    return
  }
  func.func @transform_0(%arg0: i32) -> (i32, i32) {
    %c0_i32 = arith.constant 0 : i32
    %c0_i32_0 = arith.constant 0 : i32
    return %c0_i32, %arg0 : i32, i32
  }
  func.func @transform_1(%arg0: i32) -> (i32, i32) {
    %c0_i32 = arith.constant 0 : i32
    %c0_i32_0 = arith.constant 0 : i32
    %c0_i32_1 = arith.constant 0 : i32
    return %c0_i32, %c0_i32_0 : i32, i32
  }
  func.func @transform_2(%arg0: i32) -> (i32, i32) {
    %c0_i32 = arith.constant 0 : i32
    %c0_i32_0 = arith.constant 0 : i32
    %c0_i32_1 = arith.constant 0 : i32
    return %c0_i32, %c0_i32_0 : i32, i32
  }
  func.func @transform_3(%arg0: i32) -> (i32, i32) {
    %c0_i32 = arith.constant 0 : i32
    %c0_i32_0 = arith.constant 0 : i32
    %c0_i32_1 = arith.constant 0 : i32
    return %c0_i32, %c0_i32_0 : i32, i32
  }
  func.func @transform_4(%arg0: i32) -> (i32, i32) {
    %c0_i32 = arith.constant 0 : i32
    %c0_i32_0 = arith.constant 0 : i32
    %c0_i32_1 = arith.constant 0 : i32
    return %c0_i32, %c0_i32_0 : i32, i32
  }
  func.func @transform_5(%arg0: i32) -> (i32, i32) {
    %c0_i32 = arith.constant 0 : i32
    %c0_i32_0 = arith.constant 0 : i32
    %c0_i32_1 = arith.constant 0 : i32
    return %c0_i32, %c0_i32_0 : i32, i32
  }
  func.func @transform_6(%arg0: i32) -> (i32, i32) {
    %c0_i32 = arith.constant 0 : i32
    %c0_i32_0 = arith.constant 0 : i32
    %c0_i32_1 = arith.constant 0 : i32
    return %c0_i32, %c0_i32_0 : i32, i32
  }
  func.func @transform_7(%arg0: i32) -> (i32, i32) {
    %c0_i32 = arith.constant 0 : i32
    %c0_i32_0 = arith.constant 0 : i32
    return %c0_i32, %arg0 : i32, i32
  }
}

</mosaic_0001>

<llo_original>
// kernel: tpu_custom_call.1
$region0: #{tpu_custom_call.1}
  #allocation0 [shape = 'u32[]', space=smem, size = 0x4, offset = 0x4, fixed_abs, tag = 'smem constant byte address 0x4 - core index']
  #allocation1 [shape = 'u32[144,128]{1,0:T(1,128)}', space=vmem, size = 0x12000, scoped, tag = 'internal scratch']
  #allocation2 [shape = 'f32[1,1]{1,0:T(1,128)S(6)}', space=smem, size = 0x200, scoped, tag = 'scoped memory for tpu_custom_call.1']
  %s0 = inlined_call_operand.vmem [shape: f32[16,8], index: 0, kind: input, shape index: {}]
  %s1 = inlined_call_operand.vmem [shape: bf16[128,16], index: 1, kind: input, shape index: {}]
  %s2 = inlined_call_operand.vmem [shape: f32[128,1], index: 2, kind: input, shape index: {}]
  %s3 = inlined_call_operand.vmem [shape: bf16[128,128], index: 3, kind: input, shape index: {}]
  %s4 = inlined_call_operand.vmem [shape: f32[128,1], index: 4, kind: input, shape index: {}]
  %s5 = inlined_call_operand.vmem [shape: bf16[1,128], index: 5, kind: input, shape index: {}]
  %s6 = inlined_call_operand.<no memory space> [shape: f32[1,1], index: 6, kind: input, shape index: {}]
  %s7 = inlined_call_operand.hbm [shape: f32[1,8], index: 7, kind: output, shape index: {}]
  %s8 = sld [smem:[#allocation0]]
  $region38: #{tpu_custom_call.1} parent=0
    _
  %s10 = ssub.s32 1, %s8
  %s11 = scalar_select 0, %s10, %s8
  %12 = sst [smem:[#allocation2]] %s6
  $region1: #{tpu_custom_call.1} parent=0
    #allocation3 [shape = 'u8[512]{0}', space=vmem, size = 0x400, scoped, tag = 'output window, operand 0, single buffered']
    #allocation4 [shape = 's32[1]{0}', space=sflag, size = 0x4, scoped, tag = 'scoped memory for tpu_custom_call.1']
    %13 = vsyncpa [#allocation4], 0
    // Predicated region
    $region2: #{tpu_custom_call.1} parent=1 // pred_check
      _
    $region3: #{tpu_custom_call.1} parent=1 // pred_check_branch
      %15 = sbr.rel (0) target = $region5
    $region4: #{tpu_custom_call.1} parent=1 // pred_region
      _
    $region5: #{tpu_custom_call.1} parent=1 // pred_fallthru
      _
    // Predicated region
    $region6: #{tpu_custom_call.1} parent=1 // pred_check
      _
    $region7: #{tpu_custom_call.1} parent=1 // pred_check_branch
      %17 = sbr.rel (0) target = $region9
    $region8: #{tpu_custom_call.1} parent=1 // pred_region
      _
    $region9: #{tpu_custom_call.1} parent=1 // pred_fallthru
      _
    // Predicated region
    $region10: #{tpu_custom_call.1} parent=1 // pred_check
      _
    $region11: #{tpu_custom_call.1} parent=1 // pred_check_branch
      %19 = sbr.rel (0) target = $region13
    $region12: #{tpu_custom_call.1} parent=1 // pred_region
      _
    $region13: #{tpu_custom_call.1} parent=1 // pred_fallthru
      _
    // Predicated region
    $region14: #{tpu_custom_call.1} parent=1 // pred_check
      _
    $region15: #{tpu_custom_call.1} parent=1 // pred_check_branch
      %21 = sbr.rel (0) target = $region17
    $region16: #{tpu_custom_call.1} parent=1 // pred_region
      _
    $region17: #{tpu_custom_call.1} parent=1 // pred_fallthru
      _
    // Predicated region
    $region18: #{tpu_custom_call.1} parent=1 // pred_check
      _
    $region19: #{tpu_custom_call.1} parent=1 // pred_check_branch
      %23 = sbr.rel (0) target = $region21
    $region20: #{tpu_custom_call.1} parent=1 // pred_region
      _
    $region21: #{tpu_custom_call.1} parent=1 // pred_fallthru
      _
    // Predicated region
    $region22: #{tpu_custom_call.1} parent=1 // pred_check
      _
    $region23: #{tpu_custom_call.1} parent=1 // pred_check_branch
      %25 = sbr.rel (0) target = $region25
    $region24: #{tpu_custom_call.1} parent=1 // pred_region
      _
    $region25: #{tpu_custom_call.1} parent=1 // pred_fallthru
      _
    // Predicated region
    $region26: #{tpu_custom_call.1} parent=1 // pred_check
      _
    $region27: #{tpu_custom_call.1} parent=1 // pred_check_branch
      %27 = sbr.rel (0) target = $region29
    $region28: #{tpu_custom_call.1} parent=1 // pred_region
      _
    $region29: #{tpu_custom_call.1} parent=1 // pred_fallthru
      _
    %v29 = vld [vmem:[%s0] sm:$0xff]
    %v30 = vld [vmem:[%s0 + $0x8] sm:$0xff]
    %v31 = vpack.c.bf16 %v30, %v29
    %v32 = vld [vmem:[%s1] sm:$0xf]
    %v33 = vld [vmem:[%s1 + $0x4] sm:$0xf]
    %v34 = vld [vmem:[%s1 + $0x8] sm:$0xf]
    %v35 = vld [vmem:[%s1 + $0xc] sm:$0xf]
    %v36 = vld [vmem:[%s1 + $0x10] sm:$0xf]
    %v37 = vld [vmem:[%s1 + $0x14] sm:$0xf]
    %v38 = vld [vmem:[%s1 + $0x18] sm:$0xf]
    %v39 = vld [vmem:[%s1 + $0x1c] sm:$0xf]
    %v40 = vld [vmem:[%s1 + $0x20] sm:$0xf]
    %v41 = vld [vmem:[%s1 + $0x24] sm:$0xf]
    %v42 = vld [vmem:[%s1 + $0x28] sm:$0xf]
    %v43 = vld [vmem:[%s1 + $0x2c] sm:$0xf]
    %v44 = vld [vmem:[%s1 + $0x30] sm:$0xf]
    %v45 = vld [vmem:[%s1 + $0x34] sm:$0xf]
    %v46 = vld [vmem:[%s1 + $0x38] sm:$0xf]
    %v47 = vld [vmem:[%s1 + $0x3c] sm:$0xf]
    %v48 = vld [vmem:[%s2] sm:$0xff]
    %v49 = vld [vmem:[%s2 + $0x8] sm:$0xff]
    %v50 = vld [vmem:[%s2 + $0x10] sm:$0xff]
    %v51 = vld [vmem:[%s2 + $0x18] sm:$0xff]
    %v52 = vld [vmem:[%s2 + $0x20] sm:$0xff]
    %v53 = vld [vmem:[%s2 + $0x28] sm:$0xff]
    %v54 = vld [vmem:[%s2 + $0x30] sm:$0xff]
    %v55 = vld [vmem:[%s2 + $0x38] sm:$0xff]
    %v56 = vld [vmem:[%s2 + $0x40] sm:$0xff]
    %v57 = vld [vmem:[%s2 + $0x48] sm:$0xff]
    %v58 = vld [vmem:[%s2 + $0x50] sm:$0xff]
    %v59 = vld [vmem:[%s2 + $0x58] sm:$0xff]
    %v60 = vld [vmem:[%s2 + $0x60] sm:$0xff]
    %v61 = vld [vmem:[%s2 + $0x68] sm:$0xff]
    %v62 = vld [vmem:[%s2 + $0x70] sm:$0xff]
    %v63 = vld [vmem:[%s2 + $0x78] sm:$0xff]
    %65 = vset.pattern.permute.xlu0 0
    %66 = vperm.xlu0 %65, %v48
    %v67 = vpop.permute.xlu0 %66
    %70 = vset.pattern.permute.xlu0 0
    %71 = vperm.xlu0 %70, %v49
    %v72 = vpop.permute.xlu0 %71
    %75 = vset.pattern.permute.xlu0 0
    %76 = vperm.xlu0 %75, %v50
    %v77 = vpop.permute.xlu0 %76
    %80 = vset.pattern.permute.xlu0 0
    %81 = vperm.xlu0 %80, %v51
    %v82 = vpop.permute.xlu0 %81
    %85 = vset.pattern.permute.xlu0 0
    %86 = vperm.xlu0 %85, %v52
    %v87 = vpop.permute.xlu0 %86
    %90 = vset.pattern.permute.xlu0 0
    %91 = vperm.xlu0 %90, %v53
    %v92 = vpop.permute.xlu0 %91
    %95 = vset.pattern.permute.xlu0 0
    %96 = vperm.xlu0 %95, %v54
    %v97 = vpop.permute.xlu0 %96
    %100 = vset.pattern.permute.xlu0 0
    %101 = vperm.xlu0 %100, %v55
    %v102 = vpop.permute.xlu0 %101
    %105 = vset.pattern.permute.xlu0 0
    %106 = vperm.xlu0 %105, %v56
    %v107 = vpop.permute.xlu0 %106
    %110 = vset.pattern.permute.xlu0 0
    %111 = vperm.xlu0 %110, %v57
    %v112 = vpop.permute.xlu0 %111
    %115 = vset.pattern.permute.xlu0 0
    %116 = vperm.xlu0 %115, %v58
    %v117 = vpop.permute.xlu0 %116
    %120 = vset.pattern.permute.xlu0 0
    %121 = vperm.xlu0 %120, %v59
    %v122 = vpop.permute.xlu0 %121
    %125 = vset.pattern.permute.xlu0 0
    %126 = vperm.xlu0 %125, %v60
    %v127 = vpop.permute.xlu0 %126
    %130 = vset.pattern.permute.xlu0 0
    %131 = vperm.xlu0 %130, %v61
    %v132 = vpop.permute.xlu0 %131
    %135 = vset.pattern.permute.xlu0 0
    %136 = vperm.xlu0 %135, %v62
    %v137 = vpop.permute.xlu0 %136
    %140 = vset.pattern.permute.xlu0 0
    %141 = vperm.xlu0 %140, %v63
    %v142 = vpop.permute.xlu0 %141
    %v160 = vunpack.c.l.b16 %v32
    %v161 = vunpack.c.l.b16 %v33
    %v162 = vunpack.c.l.b16 %v34
    %v163 = vunpack.c.l.b16 %v35
    %v164 = vunpack.c.l.b16 %v36
    %v165 = vunpack.c.l.b16 %v37
    %v166 = vunpack.c.l.b16 %v38
    %v167 = vunpack.c.l.b16 %v39
    %v168 = vunpack.c.l.b16 %v40
    %v169 = vunpack.c.l.b16 %v41
    %v170 = vunpack.c.l.b16 %v42
    %v171 = vunpack.c.l.b16 %v43
    %v172 = vunpack.c.l.b16 %v44
    %v173 = vunpack.c.l.b16 %v45
    %v174 = vunpack.c.l.b16 %v46
    %v175 = vunpack.c.l.b16 %v47
    %v176 = vpack.c.b16 %v161, %v160
    %v177 = vpack.c.b16 %v163, %v162
    %v178 = vpack.c.b16 %v165, %v164
    %v179 = vpack.c.b16 %v167, %v166
    %v180 = vpack.c.b16 %v169, %v168
    %v181 = vpack.c.b16 %v171, %v170
    %v182 = vpack.c.b16 %v173, %v172
    %v183 = vpack.c.b16 %v175, %v174
    %vm184 = vcmask 130048
    %v186 = vsel %vm184, %v176, 0
    %v189 = vsel %vm184, %v177, 0
    %v192 = vsel %vm184, %v178, 0
    %v195 = vsel %vm184, %v179, 0
    %v198 = vsel %vm184, %v180, 0
    %v201 = vsel %vm184, %v181, 0
    %v204 = vsel %vm184, %v182, 0
    %v207 = vsel %vm184, %v183, 0
    %209 = vmatprep.subr.bf16.mxu0 0
    %210 = vmatpush1.bf16.msra.mxu0 %v31
    %211 = vmatprep.subr.bf16.mxu0 0
    %212 = vmatpush1.bf16.msra.mxu0 0
    %213 = vmatprep.subr.bf16.mxu0 0
    %214 = vmatpush1.bf16.msra.mxu0 0
    %215 = vmatprep.subr.bf16.mxu0 0
    %216 = vmatpush1.bf16.msra.mxu0 0
    %217 = vmatprep.subr.bf16.mxu0 0
    %218 = vmatpush1.bf16.msra.mxu0 0
    %219 = vmatprep.subr.bf16.mxu0 0
    %220 = vmatpush1.bf16.msra.mxu0 0
    %221 = vmatprep.subr.bf16.mxu0 0
    %222 = vmatpush1.bf16.msra.mxu0 0
    %223 = vmatprep.subr.bf16.mxu0 0
    %224 = vmatpush1.bf16.msra.mxu0 0
    %225 = vmatprep.subr.bf16.mxu0 0
    %226 = vmatpush1.bf16.msra.mxu0 0
    %227 = vmatprep.subr.bf16.mxu0 0
    %228 = vmatpush1.bf16.msra.mxu0 0
    %229 = vmatprep.subr.bf16.mxu0 0
    %230 = vmatpush1.bf16.msra.mxu0 0
    %231 = vmatprep.subr.bf16.mxu0 0
    %232 = vmatpush1.bf16.msra.mxu0 0
    %233 = vmatprep.subr.bf16.mxu0 0
    %234 = vmatpush1.bf16.msra.mxu0 0
    %235 = vmatprep.subr.bf16.mxu0 0
    %236 = vmatpush1.bf16.msra.mxu0 0
    %237 = vmatprep.subr.bf16.mxu0 0
    %238 = vmatpush1.bf16.msra.mxu0 0
    %239 = vmatprep.subr.bf16.mxu0 0
    %240 = vmatpush1.bf16.msra.mxu0 0
    %241 = vmatprep.mubr.bf16.mxu0 0
    %242 = vmatmul.mubr.bf16.gmra.mrb[0].mxu0 %v186
    %v243 = vpop.f32.mrb[0].mxu0
    %v244 = vadd.f32 %v67, %v243
    %v245 = vpop.f32.mrb[0].mxu0
    %v246 = vpop.f32.mrb[0].mxu0
    %v247 = vadd.f32 %v72, %v246
    %v248 = vpop.f32.mrb[0].mxu0
    %249 = vmatprep.mubr.bf16.mxu0 0
    %250 = vmatmul.mubr.bf16.gmra.mrb[0].mxu0 %v189
    %v251 = vpop.f32.mrb[0].mxu0
    %v252 = vadd.f32 %v77, %v251
    %v253 = vpop.f32.mrb[0].mxu0
    %v254 = vpop.f32.mrb[0].mxu0
    %v255 = vadd.f32 %v82, %v254
    %v256 = vpop.f32.mrb[0].mxu0
    %257 = vmatprep.mubr.bf16.mxu0 0
    %258 = vmatmul.mubr.bf16.gmra.mrb[0].mxu0 %v192
    %v259 = vpop.f32.mrb[0].mxu0
    %v260 = vadd.f32 %v87, %v259
    %v261 = vpop.f32.mrb[0].mxu0
    %v262 = vpop.f32.mrb[0].mxu0
    %v263 = vadd.f32 %v92, %v262
    %v264 = vpop.f32.mrb[0].mxu0
    %265 = vmatprep.mubr.bf16.mxu0 0
    %266 = vmatmul.mubr.bf16.gmra.mrb[0].mxu0 %v195
    %v267 = vpop.f32.mrb[0].mxu0
    %v268 = vadd.f32 %v97, %v267
    %v269 = vpop.f32.mrb[0].mxu0
    %v270 = vpop.f32.mrb[0].mxu0
    %v271 = vadd.f32 %v102, %v270
    %v272 = vpop.f32.mrb[0].mxu0
    %273 = vmatprep.mubr.bf16.mxu0 0
    %274 = vmatmul.mubr.bf16.gmra.mrb[0].mxu0 %v198
    %v275 = vpop.f32.mrb[0].mxu0
    %v276 = vadd.f32 %v107, %v275
    %v277 = vpop.f32.mrb[0].mxu0
    %v278 = vpop.f32.mrb[0].mxu0
    %v279 = vadd.f32 %v112, %v278
    %v280 = vpop.f32.mrb[0].mxu0
    %281 = vmatprep.mubr.bf16.mxu0 0
    %282 = vmatmul.mubr.bf16.gmra.mrb[0].mxu0 %v201
    %v283 = vpop.f32.mrb[0].mxu0
    %v284 = vadd.f32 %v117, %v283
    %v285 = vpop.f32.mrb[0].mxu0
    %v286 = vpop.f32.mrb[0].mxu0
    %v287 = vadd.f32 %v122, %v286
    %v288 = vpop.f32.mrb[0].mxu0
    %289 = vmatprep.mubr.bf16.mxu0 0
    %290 = vmatmul.mubr.bf16.gmra.mrb[0].mxu0 %v204
    %v291 = vpop.f32.mrb[0].mxu0
    %v292 = vadd.f32 %v127, %v291
    %v293 = vpop.f32.mrb[0].mxu0
    %v294 = vpop.f32.mrb[0].mxu0
    %v295 = vadd.f32 %v132, %v294
    %v296 = vpop.f32.mrb[0].mxu0
    %297 = vmatprep.mubr.bf16.mxu0 0
    %298 = vmatmul.mubr.bf16.gmra.mrb[0].mxu0 %v207
    %v299 = vpop.f32.mrb[0].mxu0
    %v300 = vadd.f32 %v137, %v299
    %v301 = vpop.f32.mrb[0].mxu0
    %v302 = vpop.f32.mrb[0].mxu0
    %v303 = vadd.f32 %v142, %v302
    %v304 = vpop.f32.mrb[0].mxu0
    %305 = vdwg.mxu0
    %v306 = vmax.f32 %v244, 0.0
    %v307 = vmax.f32 %v247, 0.0
    %v308 = vmax.f32 %v252, 0.0
    %v309 = vmax.f32 %v255, 0.0
    %v310 = vmax.f32 %v260, 0.0
    %v311 = vmax.f32 %v263, 0.0
    %v312 = vmax.f32 %v268, 0.0
    %v313 = vmax.f32 %v271, 0.0
    %v314 = vmax.f32 %v276, 0.0
    %v315 = vmax.f32 %v279, 0.0
    %v316 = vmax.f32 %v284, 0.0
    %v317 = vmax.f32 %v287, 0.0
    %v318 = vmax.f32 %v292, 0.0
    %v319 = vmax.f32 %v295, 0.0
    %v320 = vmax.f32 %v300, 0.0
    %v321 = vmax.f32 %v303, 0.0
    %v322 = vld [vmem:[%s3] sm:$0xf]
    %v323 = vld [vmem:[%s3 + $0x4] sm:$0xf]
    %v324 = vld [vmem:[%s3 + $0x8] sm:$0xf]
    %v325 = vld [vmem:[%s3 + $0xc] sm:$0xf]
    %v326 = vld [vmem:[%s3 + $0x10] sm:$0xf]
    %v327 = vld [vmem:[%s3 + $0x14] sm:$0xf]
    %v328 = vld [vmem:[%s3 + $0x18] sm:$0xf]
    %v329 = vld [vmem:[%s3 + $0x1c] sm:$0xf]
    %v330 = vld [vmem:[%s3 + $0x20] sm:$0xf]
    %v331 = vld [vmem:[%s3 + $0x24] sm:$0xf]
    %v332 = vld [vmem:[%s3 + $0x28] sm:$0xf]
    %v333 = vld [vmem:[%s3 + $0x2c] sm:$0xf]
    %v334 = vld [vmem:[%s3 + $0x30] sm:$0xf]
    %v335 = vld [vmem:[%s3 + $0x34] sm:$0xf]
    %v336 = vld [vmem:[%s3 + $0x38] sm:$0xf]
    %v337 = vld [vmem:[%s3 + $0x3c] sm:$0xf]
    %v338 = vpack.c.bf16 %v307, %v306
    %v339 = vpack.c.bf16 %v309, %v308
    %v340 = vpack.c.bf16 %v311, %v310
    %v341 = vpack.c.bf16 %v313, %v312
    %v342 = vpack.c.bf16 %v315, %v314
    %v343 = vpack.c.bf16 %v317, %v316
    %v344 = vpack.c.bf16 %v319, %v318
    %v345 = vpack.c.bf16 %v321, %v320
    %v346 = vld [vmem:[%s4] sm:$0xff]
    %v347 = vld [vmem:[%s4 + $0x8] sm:$0xff]
    %v348 = vld [vmem:[%s4 + $0x10] sm:$0xff]
    %v349 = vld [vmem:[%s4 + $0x18] sm:$0xff]
    %v350 = vld [vmem:[%s4 + $0x20] sm:$0xff]
    %v351 = vld [vmem:[%s4 + $0x28] sm:$0xff]
    %v352 = vld [vmem:[%s4 + $0x30] sm:$0xff]
    %v353 = vld [vmem:[%s4 + $0x38] sm:$0xff]
    %v354 = vld [vmem:[%s4 + $0x40] sm:$0xff]
    %v355 = vld [vmem:[%s4 + $0x48] sm:$0xff]
    %v356 = vld [vmem:[%s4 + $0x50] sm:$0xff]
    %v357 = vld [vmem:[%s4 + $0x58] sm:$0xff]
    %v358 = vld [vmem:[%s4 + $0x60] sm:$0xff]
    %v359 = vld [vmem:[%s4 + $0x68] sm:$0xff]
    %v360 = vld [vmem:[%s4 + $0x70] sm:$0xff]
    %v361 = vld [vmem:[%s4 + $0x78] sm:$0xff]
    %363 = vset.pattern.permute.xlu0 0
    %364 = vperm.xlu0 %363, %v346
    %v365 = vpop.permute.xlu0 %364
    %368 = vset.pattern.permute.xlu0 0
    %369 = vperm.xlu0 %368, %v347
    %v370 = vpop.permute.xlu0 %369
    %373 = vset.pattern.permute.xlu0 0
    %374 = vperm.xlu0 %373, %v348
    %v375 = vpop.permute.xlu0 %374
    %378 = vset.pattern.permute.xlu0 0
    %379 = vperm.xlu0 %378, %v349
    %v380 = vpop.permute.xlu0 %379
    %383 = vset.pattern.permute.xlu0 0
    %384 = vperm.xlu0 %383, %v350
    %v385 = vpop.permute.xlu0 %384
    %388 = vset.pattern.permute.xlu0 0
    %389 = vperm.xlu0 %388, %v351
    %v390 = vpop.permute.xlu0 %389
    %393 = vset.pattern.permute.xlu0 0
    %394 = vperm.xlu0 %393, %v352
    %v395 = vpop.permute.xlu0 %394
    %398 = vset.pattern.permute.xlu0 0
    %399 = vperm.xlu0 %398, %v353
    %v400 = vpop.permute.xlu0 %399
    %403 = vset.pattern.permute.xlu0 0
    %404 = vperm.xlu0 %403, %v354
    %v405 = vpop.permute.xlu0 %404
    %408 = vset.pattern.permute.xlu0 0
    %409 = vperm.xlu0 %408, %v355
    %v410 = vpop.permute.xlu0 %409
    %413 = vset.pattern.permute.xlu0 0
    %414 = vperm.xlu0 %413, %v356
    %v415 = vpop.permute.xlu0 %414
    %418 = vset.pattern.permute.xlu0 0
    %419 = vperm.xlu0 %418, %v357
    %v420 = vpop.permute.xlu0 %419
    %423 = vset.pattern.permute.xlu0 0
    %424 = vperm.xlu0 %423, %v358
    %v425 = vpop.permute.xlu0 %424
    %428 = vset.pattern.permute.xlu0 0
    %429 = vperm.xlu0 %428, %v359
    %v430 = vpop.permute.xlu0 %429
    %433 = vset.pattern.permute.xlu0 0
    %434 = vperm.xlu0 %433, %v360
    %v435 = vpop.permute.xlu0 %434
    %438 = vset.pattern.permute.xlu0 0
    %439 = vperm.xlu0 %438, %v361
    %v440 = vpop.permute.xlu0 %439
    %v458 = vunpack.c.l.b16 %v322
    %v459 = vunpack.c.l.b16 %v323
    %v460 = vunpack.c.l.b16 %v324
    %v461 = vunpack.c.l.b16 %v325
    %v462 = vunpack.c.l.b16 %v326
    %v463 = vunpack.c.l.b16 %v327
    %v464 = vunpack.c.l.b16 %v328
    %v465 = vunpack.c.l.b16 %v329
    %v466 = vunpack.c.l.b16 %v330
    %v467 = vunpack.c.l.b16 %v331
    %v468 = vunpack.c.l.b16 %v332
    %v469 = vunpack.c.l.b16 %v333
    %v470 = vunpack.c.l.b16 %v334
    %v471 = vunpack.c.l.b16 %v335
    %v472 = vunpack.c.l.b16 %v336
    %v473 = vunpack.c.l.b16 %v337
    %v474 = vpack.c.b16 %v459, %v458
    %v475 = vpack.c.b16 %v461, %v460
    %v476 = vpack.c.b16 %v463, %v462
    %v477 = vpack.c.b16 %v465, %v464
    %v478 = vpack.c.b16 %v467, %v466
    %v479 = vpack.c.b16 %v469, %v468
    %v480 = vpack.c.b16 %v471, %v470
    %v481 = vpack.c.b16 %v473, %v472
    %490 = vmatprep.subr.bf16.mxu0 0
    %491 = vmatpush1.bf16.msra.mxu0 %v338
    %492 = vmatprep.subr.bf16.mxu0 0
    %493 = vmatpush1.bf16.msra.mxu0 %v339
    %494 = vmatprep.subr.bf16.mxu0 0
    %495 = vmatpush1.bf16.msra.mxu0 %v340
    %496 = vmatprep.subr.bf16.mxu0 0
    %497 = vmatpush1.bf16.msra.mxu0 %v341
    %498 = vmatprep.subr.bf16.mxu0 0
    %499 = vmatpush1.bf16.msra.mxu0 %v342
    %500 = vmatprep.subr.bf16.mxu0 0
    %501 = vmatpush1.bf16.msra.mxu0 %v343
    %502 = vmatprep.subr.bf16.mxu0 0
    %503 = vmatpush1.bf16.msra.mxu0 %v344
    %504 = vmatprep.subr.bf16.mxu0 0
    %505 = vmatpush1.bf16.msra.mxu0 %v345
    %506 = vmatprep.subr.bf16.mxu0 0
    %507 = vmatpush1.bf16.msra.mxu0 0
    %508 = vmatprep.subr.bf16.mxu0 0
    %509 = vmatpush1.bf16.msra.mxu0 0
    %510 = vmatprep.subr.bf16.mxu0 0
    %511 = vmatpush1.bf16.msra.mxu0 0
    %512 = vmatprep.subr.bf16.mxu0 0
    %513 = vmatpush1.bf16.msra.mxu0 0
    %514 = vmatprep.subr.bf16.mxu0 0
    %515 = vmatpush1.bf16.msra.mxu0 0
    %516 = vmatprep.subr.bf16.mxu0 0
    %517 = vmatpush1.bf16.msra.mxu0 0
    %518 = vmatprep.subr.bf16.mxu0 0
    %519 = vmatpush1.bf16.msra.mxu0 0
    %520 = vmatprep.subr.bf16.mxu0 0
    %521 = vmatpush1.bf16.msra.mxu0 0
    %522 = vmatprep.mubr.bf16.mxu0 0
    %523 = vmatmul.mubr.bf16.gmra.mrb[0].mxu0 %v474
    %v524 = vpop.f32.mrb[0].mxu0
    %v525 = vadd.f32 %v365, %v524
    %v526 = vpop.f32.mrb[0].mxu0
    %v527 = vpop.f32.mrb[0].mxu0
    %v528 = vadd.f32 %v370, %v527
    %v529 = vpop.f32.mrb[0].mxu0
    %530 = vmatprep.mubr.bf16.mxu0 0
    %531 = vmatmul.mubr.bf16.gmra.mrb[0].mxu0 %v475
    %v532 = vpop.f32.mrb[0].mxu0
    %v533 = vadd.f32 %v375, %v532
    %v534 = vpop.f32.mrb[0].mxu0
    %v535 = vpop.f32.mrb[0].mxu0
    %v536 = vadd.f32 %v380, %v535
    %v537 = vpop.f32.mrb[0].mxu0
    %538 = vmatprep.mubr.bf16.mxu0 0
    %539 = vmatmul.mubr.bf16.gmra.mrb[0].mxu0 %v476
    %v540 = vpop.f32.mrb[0].mxu0
    %v541 = vadd.f32 %v385, %v540
    %v542 = vpop.f32.mrb[0].mxu0
    %v543 = vpop.f32.mrb[0].mxu0
    %v544 = vadd.f32 %v390, %v543
    %v545 = vpop.f32.mrb[0].mxu0
    %546 = vmatprep.mubr.bf16.mxu0 0
    %547 = vmatmul.mubr.bf16.gmra.mrb[0].mxu0 %v477
    %v548 = vpop.f32.mrb[0].mxu0
    %v549 = vadd.f32 %v395, %v548
    %v550 = vpop.f32.mrb[0].mxu0
    %v551 = vpop.f32.mrb[0].mxu0
    %v552 = vadd.f32 %v400, %v551
    %v553 = vpop.f32.mrb[0].mxu0
    %554 = vmatprep.mubr.bf16.mxu0 0
    %555 = vmatmul.mubr.bf16.gmra.mrb[0].mxu0 %v478
    %v556 = vpop.f32.mrb[0].mxu0
    %v557 = vadd.f32 %v405, %v556
    %v558 = vpop.f32.mrb[0].mxu0
    %v559 = vpop.f32.mrb[0].mxu0
    %v560 = vadd.f32 %v410, %v559
    %v561 = vpop.f32.mrb[0].mxu0
    %562 = vmatprep.mubr.bf16.mxu0 0
    %563 = vmatmul.mubr.bf16.gmra.mrb[0].mxu0 %v479
    %v564 = vpop.f32.mrb[0].mxu0
    %v565 = vadd.f32 %v415, %v564
    %v566 = vpop.f32.mrb[0].mxu0
    %v567 = vpop.f32.mrb[0].mxu0
    %v568 = vadd.f32 %v420, %v567
    %v569 = vpop.f32.mrb[0].mxu0
    %570 = vmatprep.mubr.bf16.mxu0 0
    %571 = vmatmul.mubr.bf16.gmra.mrb[0].mxu0 %v480
    %v572 = vpop.f32.mrb[0].mxu0
    %v573 = vadd.f32 %v425, %v572
    %v574 = vpop.f32.mrb[0].mxu0
    %v575 = vpop.f32.mrb[0].mxu0
    %v576 = vadd.f32 %v430, %v575
    %v577 = vpop.f32.mrb[0].mxu0
    %578 = vmatprep.mubr.bf16.mxu0 0
    %579 = vmatmul.mubr.bf16.gmra.mrb[0].mxu0 %v481
    %v580 = vpop.f32.mrb[0].mxu0
    %v581 = vadd.f32 %v435, %v580
    %v582 = vpop.f32.mrb[0].mxu0
    %v583 = vpop.f32.mrb[0].mxu0
    %v584 = vadd.f32 %v440, %v583
    %v585 = vpop.f32.mrb[0].mxu0
    %586 = vdwg.mxu0
    %v587 = vmax.f32 %v525, 0.0
    %v588 = vmax.f32 %v528, 0.0
    %v589 = vmax.f32 %v533, 0.0
    %v590 = vmax.f32 %v536, 0.0
    %v591 = vmax.f32 %v541, 0.0
    %v592 = vmax.f32 %v544, 0.0
    %v593 = vmax.f32 %v549, 0.0
    %v594 = vmax.f32 %v552, 0.0
    %v595 = vmax.f32 %v557, 0.0
    %v596 = vmax.f32 %v560, 0.0
    %v597 = vmax.f32 %v565, 0.0
    %v598 = vmax.f32 %v568, 0.0
    %v599 = vmax.f32 %v573, 0.0
    %v600 = vmax.f32 %v576, 0.0
    %v601 = vmax.f32 %v581, 0.0
    %v602 = vmax.f32 %v584, 0.0
    %v603 = vld [vmem:[%s5] sm:$0x1]
    %v604 = vpack.c.bf16 %v588, %v587
    %v605 = vpack.c.bf16 %v590, %v589
    %v606 = vpack.c.bf16 %v592, %v591
    %v607 = vpack.c.bf16 %v594, %v593
    %v608 = vpack.c.bf16 %v596, %v595
    %v609 = vpack.c.bf16 %v598, %v597
    %v610 = vpack.c.bf16 %v600, %v599
    %v611 = vpack.c.bf16 %v602, %v601
    %s612 = sld [smem:[#allocation2]]
    %v613 = vstv %s612
    %614 = vmatprep.subr.bf16.mxu0 0
    %615 = vmatpush1.bf16.msra.mxu0 %v604
    %616 = vmatprep.subr.bf16.mxu0 0
    %617 = vmatpush1.bf16.msra.mxu0 %v605
    %618 = vmatprep.subr.bf16.mxu0 0
    %619 = vmatpush1.bf16.msra.mxu0 %v606
    %620 = vmatprep.subr.bf16.mxu0 0
    %621 = vmatpush1.bf16.msra.mxu0 %v607
    %622 = vmatprep.subr.bf16.mxu0 0
    %623 = vmatpush1.bf16.msra.mxu0 %v608
    %624 = vmatprep.subr.bf16.mxu0 0
    %625 = vmatpush1.bf16.msra.mxu0 %v609
    %626 = vmatprep.subr.bf16.mxu0 0
    %627 = vmatpush1.bf16.msra.mxu0 %v610
    %628 = vmatprep.subr.bf16.mxu0 0
    %629 = vmatpush1.bf16.msra.mxu0 %v611
    %630 = vmatprep.subr.bf16.mxu0 0
    %631 = vmatpush1.bf16.msra.mxu0 0
    %632 = vmatprep.subr.bf16.mxu0 0
    %633 = vmatpush1.bf16.msra.mxu0 0
    %634 = vmatprep.subr.bf16.mxu0 0
    %635 = vmatpush1.bf16.msra.mxu0 0
    %636 = vmatprep.subr.bf16.mxu0 0
    %637 = vmatpush1.bf16.msra.mxu0 0
    %638 = vmatprep.subr.bf16.mxu0 0
    %639 = vmatpush1.bf16.msra.mxu0 0
    %640 = vmatprep.subr.bf16.mxu0 0
    %641 = vmatpush1.bf16.msra.mxu0 0
    %642 = vmatprep.subr.bf16.mxu0 0
    %643 = vmatpush1.bf16.msra.mxu0 0
    %644 = vmatprep.subr.bf16.mxu0 0
    %645 = vmatpush1.bf16.msra.mxu0 0
    %646 = vmatprep.mubr.bf16.mxu0 0
    %647 = vmatmul.mubr.bf16.gmra.mrb[0].mxu0 %v603
    %v648 = vpop.f32.mrb[0].mxu0
    %v649 = vadd.f32 %v613, %v648
    %v650 = vpop.f32.mrb[0].mxu0
    %v651 = vpop.f32.mrb[0].mxu0
    %v652 = vpop.f32.mrb[0].mxu0
    %653 = vdwg.mxu0
    %vm654 = vcmask 57344
    %655 = vst.msk [vmem:[#allocation3] sm:$0x1] %vm654, %v649
    // Predicated region
    $region30: #{tpu_custom_call.1} parent=1 // pred_check
      _
    $region31: #{tpu_custom_call.1} parent=1 // pred_check_branch
      %657 = sbr.rel (0) target = $region33
    $region32: #{tpu_custom_call.1} parent=1 // pred_region
      %s659 = ssub.s32 16, 16
      %660 = vsyncadd [#allocation4], %s659
      %s662 = sshll.u32 [#allocation3], 4
      %s663 = int_to_ptr.vmem [resolvable:$true] %s662
      %665 = dma.vmem_to_hbm [thread:$0]  %s663, 16, %s7, [#allocation4]
    $region33: #{tpu_custom_call.1} parent=1 // pred_fallthru
      _
    // Predicated region
    $region34: #{tpu_custom_call.1} parent=1 // pred_check
      _
    $region35: #{tpu_custom_call.1} parent=1 // pred_check_branch
      %667 = sbr.rel (0) target = $region37
    $region36: #{tpu_custom_call.1} parent=1 // pred_region
      %668 = dma.done [#allocation4], 16
    $region37: #{tpu_custom_call.1} parent=1 // pred_fallthru
      _
    %669 = vsyncpa [#allocation4], 1

</llo_original>
